<compile_context>
chip_gen: v5e
topology: v5e:2x2
jax: 0.10.0
libtpu: 0.0.40
codegen_flags: <defaults>
</compile_context>

<pallas_src>
import jax
import jax.numpy as jnp
from jax.experimental import pallas as pl
from jax.experimental.pallas import tpu as pltpu

LANE = 128


def _round_up(n, m):
    return ((n + m - 1) // m) * m


# ----------------------------- Pallas kernel --------------------------------

def _make_fused_kernel(n_hidden):
    """Fused forward: x -> [bf16 matmul -> +shift -> PReLU]_l -> bf16 matmul -> +bias.

    Ref order: x, (w0, s0, w1, s1, ...), w_out, b_out, alpha(SMEM), out
    """
    def kernel(*refs):
        x_ref = refs[0]
        w_out_ref = refs[-4]
        b_out_ref = refs[-3]
        alpha_ref = refs[-2]          # (n_hidden,) f32 scalars in SMEM
        o_ref = refs[-1]

        h = x_ref[...]                # (TB, F) f32
        for l in range(n_hidden):     # unrolled at trace time (static layer count)
            w_ref = refs[1 + 2 * l]   # (in, out_pad) bf16, BN scale pre-folded
            s_ref = refs[2 + 2 * l]   # (1, out_pad)  f32,  BN shift
            a = alpha_ref[l]          # shared PReLU alpha (scalar)
            z = jnp.dot(h.astype(jnp.bfloat16), w_ref[...],
                        preferred_element_type=jnp.float32)
            z = z + s_ref[...]                        # f32 epilogue
            h = jnp.where(z > 0, z, a * z)            # PReLU in f32
        z = jnp.dot(h.astype(jnp.bfloat16), w_out_ref[...],
                    preferred_element_type=jnp.float32)
        o_ref[...] = z + b_out_ref[...]

    return kernel


# ------------------------------ Param prep ----------------------------------

def init_moa_params(key, n_features, n_targets, layers):
    """Raw parameters mirroring the PyTorch module (eval-mode buffers included)."""
    hidden = []
    n_in = n_features
    for n_out in layers:
        key, kw = jax.random.split(key)
        bound = 1.0 / jnp.sqrt(jnp.float32(n_in))
        w = jax.random.uniform(kw, (n_out, n_in), jnp.float32, -bound, bound)  # bias=False
        hidden.append(dict(
            w=w,
            gamma=jnp.ones((n_out,), jnp.float32),
            beta=jnp.zeros((n_out,), jnp.float32),
            running_mean=jnp.zeros((n_out,), jnp.float32),
            running_var=jnp.ones((n_out,), jnp.float32),
            alpha=jnp.array(0.25, jnp.float32),          # nn.PReLU default
        ))
        n_in = n_out
    key, kw, kb = jax.random.split(key, 3)
    bound = 1.0 / jnp.sqrt(jnp.float32(n_in))
    w_out = jax.random.uniform(kw, (n_targets, n_in), jnp.float32, -bound, bound)
    b_out = jax.random.uniform(kb, (n_targets,), jnp.float32, -bound, bound)
    return hidden, (w_out, b_out)


def prepare_params(hidden_params, head_params, eps=1e-5):
    """ONE-TIME prep: fold BN (eval) into transposed weights, pad OUT dims to 128,
    store matmul operands in bf16 (accumulation stays f32 in the kernel)."""
    ws, shifts, alphas = [], [], []
    n_features = hidden_params[0]["w"].shape[1]
    prev_dim = n_features            # layer-0 K stays at the natural feature count
    for p in hidden_params:
        w = p["w"]                                    # (n_out, n_in)
        n_out, n_in = w.shape
        out_pad = _round_up(n_out, LANE)
        scale = p["gamma"] / jnp.sqrt(p["running_var"] + eps)
        shift = p["beta"] - p["running_mean"] * scale
        wT = w.T * scale[None, :]                     # fold BN scale into columns (f32)
        wT_p = jnp.zeros((prev_dim, out_pad), jnp.float32).at[:n_in, :n_out].set(wT)
        s_p = jnp.zeros((1, out_pad), jnp.float32).at[0, :n_out].set(shift)
        ws.append(wT_p.astype(jnp.bfloat16))
        shifts.append(s_p)
        alphas.append(jnp.asarray(p["alpha"], jnp.float32).reshape(()))
        prev_dim = out_pad

    w_out, b_out = head_params
    n_t, n_last = w_out.shape
    t_pad = _round_up(n_t, LANE)
    w_out_p = jnp.zeros((prev_dim, t_pad), jnp.float32).at[:n_last, :n_t].set(w_out.T)
    b_out_p = jnp.zeros((1, t_pad), jnp.float32).at[0, :n_t].set(b_out)

    return dict(
        ws=ws, shifts=shifts,
        w_out=w_out_p.astype(jnp.bfloat16), b_out=b_out_p,
        alphas=jnp.stack(alphas),
        n_features=n_features, n_targets=n_t, t_pad=t_pad,
    )


# ------------------------------ Forward pass ---------------------------------

def moa_forward(x, prepared, batch_tile=1024, min_rows_for_split=256):
    B, F = x.shape
    assert F == prepared["n_features"]
    t_pad = prepared["t_pad"]
    n_hidden = len(prepared["ws"])

    # Batch tiling: pad B only to a multiple of 8; near-even cdiv-based tiles so the
    # worst-case waste is 7 rows. Force >=2 grid steps at realistic batch sizes so both
    # v7x TensorCores get work on the "parallel" axis (irrelevant for tiny batches).
    B_pad8 = _round_up(B, 8)
    n_tiles = pl.cdiv(B_pad8, batch_tile)
    if B_pad8 >= min_rows_for_split:
        n_tiles = max(n_tiles, 2)
    TB = _round_up(pl.cdiv(B_pad8, n_tiles), 8)
    B_pad = n_tiles * TB
    x_p = x if B_pad == B else jnp.pad(x, ((0, B_pad - B), (0, 0)))

    # x keeps its natural (B, F) last dim: block (TB, F) is legal because F equals the
    # full array dim -> no lane padding of the input, no wrapper-side materialization.
    in_specs = [pl.BlockSpec((TB, F), lambda i: (i, 0))]
    operands = [x_p]
    for wT_p, s_p in zip(prepared["ws"], prepared["shifts"]):
        in_specs.append(pl.BlockSpec(wT_p.shape, lambda i: (0, 0)))   # grid-invariant
        in_specs.append(pl.BlockSpec(s_p.shape, lambda i: (0, 0)))
        operands += [wT_p, s_p]
    in_specs.append(pl.BlockSpec(prepared["w_out"].shape, lambda i: (0, 0)))
    in_specs.append(pl.BlockSpec(prepared["b_out"].shape, lambda i: (0, 0)))
    operands += [prepared["w_out"], prepared["b_out"]]
    in_specs.append(pl.BlockSpec(memory_space=pltpu.SMEM))            # PReLU alphas
    operands.append(prepared["alphas"])

    # Output kept lane-dense at 128 wide (unmasked vst); sliced to n_targets outside.
    out_p = pl.pallas_call(
        _make_fused_kernel(n_hidden),
        out_shape=jax.ShapeDtypeStruct((B_pad, t_pad), jnp.float32),
        grid=(n_tiles,),
        in_specs=in_specs,
        out_specs=pl.BlockSpec((TB, t_pad), lambda i: (i, 0)),
        compiler_params=pltpu.CompilerParams(dimension_semantics=("parallel",)),
    )(*operands)

    return out_p[:B, :prepared["n_targets"]]


# --------------------------------- main --------------------------------------

if __name__ == "__main__":
    n_features = 32
    n_targets = 16
    layers = [64, 32]
    batch = 8

    key = jax.random.PRNGKey(0)
    key, kx = jax.random.split(key)
    x = jax.random.normal(kx, (batch, n_features), jnp.float32)

    hidden_params, head_params = init_moa_params(key, n_features, n_targets, layers)
    prepared = prepare_params(hidden_params, head_params)   # one-time fold/transpose/pad

    out = moa_forward(x, prepared)
    out = jax.block_until_ready(out)

    # Reference check in plain JAX f32 (same eval-mode math, unfolded params).
    # Tolerance loosened because kernel matmul operands are bf16 (f32 accumulate).
    eps = 1e-5
    h = x
    for p in hidden_params:
        z = h @ p["w"].T
        scale = p["gamma"] / jnp.sqrt(p["running_var"] + eps)
        shift = p["beta"] - p["running_mean"] * scale
        z = z * scale[None, :] + shift[None, :]
        h = jnp.where(z > 0, z, p["alpha"] * z)
    ref = h @ head_params[0].T + head_params[1][None, :]

    assert out.shape == (batch, n_targets)
    assert jnp.allclose(out, ref, atol=2e-2, rtol=2e-2), \
        f"max abs diff {jnp.max(jnp.abs(out - ref))}"

    print("KERNEL_OK")
</pallas_src>

<mosaic_0001>
module attributes {stable_mosaic.version = 11 : i64} {
  func.func @kernel(%arg0: i32, %arg1: memref<8x32xf32, #tpu.memory_space<vmem>>, %arg2: memref<32x128xbf16, #tpu.memory_space<vmem>>, %arg3: memref<1x128xf32, #tpu.memory_space<vmem>>, %arg4: memref<128x128xbf16, #tpu.memory_space<vmem>>, %arg5: memref<1x128xf32, #tpu.memory_space<vmem>>, %arg6: memref<128x128xbf16, #tpu.memory_space<vmem>>, %arg7: memref<1x128xf32, #tpu.memory_space<vmem>>, %arg8: memref<2xf32, #tpu.memory_space<smem>>, %arg9: memref<8x128xf32, #tpu.memory_space<vmem>>) attributes {dimension_semantics = [#tpu.dimension_semantics<parallel>], iteration_bounds = array<i64: 1>, scalar_prefetch = 0 : i64, scratch_operands = 0 : i64, tpu.core_type = #tpu.core_type<tc>, window_params = [{transform_indices = @transform_0, window_bounds = array<i64: 8, 32>}, {pipeline_mode = #tpu.pipeline_mode<synchronous>, transform_indices = @transform_1, window_bounds = array<i64: 32, 128>}, {pipeline_mode = #tpu.pipeline_mode<synchronous>, transform_indices = @transform_2, window_bounds = array<i64: 1, 128>}, {pipeline_mode = #tpu.pipeline_mode<synchronous>, transform_indices = @transform_3, window_bounds = array<i64: 128, 128>}, {pipeline_mode = #tpu.pipeline_mode<synchronous>, transform_indices = @transform_4, window_bounds = array<i64: 1, 128>}, {pipeline_mode = #tpu.pipeline_mode<synchronous>, transform_indices = @transform_5, window_bounds = array<i64: 128, 128>}, {pipeline_mode = #tpu.pipeline_mode<synchronous>, transform_indices = @transform_6, window_bounds = array<i64: 1, 128>}, {transform_indices = @transform_7, window_bounds = array<i64: 2>}, {transform_indices = @transform_8, window_bounds = array<i64: 8, 128>}]} {
    %c0 = arith.constant 0 : index
    %c0_0 = arith.constant 0 : index
    %0 = vector.load %arg1[%c0, %c0_0] : memref<8x32xf32, #tpu.memory_space<vmem>>, vector<8x32xf32>
    %c0_1 = arith.constant 0 : index
    %1 = memref.load %arg8[%c0_1] : memref<2xf32, #tpu.memory_space<smem>>
    %2 = arith.truncf %0 : vector<8x32xf32> to vector<8x32xbf16>
    %c0_2 = arith.constant 0 : index
    %c0_3 = arith.constant 0 : index
    %3 = vector.load %arg2[%c0_2, %c0_3] : memref<32x128xbf16, #tpu.memory_space<vmem>>, vector<32x128xbf16>
    %cst = arith.constant dense<0.000000e+00> : vector<8x128xf32>
    %4 = tpu.matmul %2, %3, %cst {dimension_numbers = #tpu.dot_dimension_numbers<[1], [0], [0], [1], [0, 0, 1, 1], [], []>} : vector<8x32xbf16>, vector<32x128xbf16>, vector<8x128xf32> -> vector<8x128xf32>
    %c0_4 = arith.constant 0 : index
    %c0_5 = arith.constant 0 : index
    %5 = vector.load %arg3[%c0_4, %c0_5] : memref<1x128xf32, #tpu.memory_space<vmem>>, vector<1x128xf32>
    %6 = vector.broadcast %5 : vector<1x128xf32> to vector<8x128xf32>
    %7 = arith.addf %4, %6 : vector<8x128xf32>
    %cst_6 = arith.constant 0.000000e+00 : f32
    %8 = vector.broadcast %cst_6 : f32 to vector<8x128xf32>
    %9 = arith.cmpf ogt, %7, %8 : vector<8x128xf32>
    %10 = vector.broadcast %1 : f32 to vector<8x128xf32>
    %11 = arith.mulf %10, %7 : vector<8x128xf32>
    %12 = arith.select %9, %7, %11 : vector<8x128xi1>, vector<8x128xf32>
    %c1 = arith.constant 1 : index
    %13 = memref.load %arg8[%c1] : memref<2xf32, #tpu.memory_space<smem>>
    %14 = arith.truncf %12 : vector<8x128xf32> to vector<8x128xbf16>
    %c0_7 = arith.constant 0 : index
    %c0_8 = arith.constant 0 : index
    %15 = vector.load %arg4[%c0_7, %c0_8] : memref<128x128xbf16, #tpu.memory_space<vmem>>, vector<128x128xbf16>
    %cst_9 = arith.constant dense<0.000000e+00> : vector<8x128xf32>
    %16 = tpu.matmul %14, %15, %cst_9 {dimension_numbers = #tpu.dot_dimension_numbers<[1], [0], [0], [1], [0, 0, 1, 1], [], []>} : vector<8x128xbf16>, vector<128x128xbf16>, vector<8x128xf32> -> vector<8x128xf32>
    %c0_10 = arith.constant 0 : index
    %c0_11 = arith.constant 0 : index
    %17 = vector.load %arg5[%c0_10, %c0_11] : memref<1x128xf32, #tpu.memory_space<vmem>>, vector<1x128xf32>
    %18 = vector.broadcast %17 : vector<1x128xf32> to vector<8x128xf32>
    %19 = arith.addf %16, %18 : vector<8x128xf32>
    %cst_12 = arith.constant 0.000000e+00 : f32
    %20 = vector.broadcast %cst_12 : f32 to vector<8x128xf32>
    %21 = arith.cmpf ogt, %19, %20 : vector<8x128xf32>
    %22 = vector.broadcast %13 : f32 to vector<8x128xf32>
    %23 = arith.mulf %22, %19 : vector<8x128xf32>
    %24 = arith.select %21, %19, %23 : vector<8x128xi1>, vector<8x128xf32>
    %25 = arith.truncf %24 : vector<8x128xf32> to vector<8x128xbf16>
    %c0_13 = arith.constant 0 : index
    %c0_14 = arith.constant 0 : index
    %26 = vector.load %arg6[%c0_13, %c0_14] : memref<128x128xbf16, #tpu.memory_space<vmem>>, vector<128x128xbf16>
    %cst_15 = arith.constant dense<0.000000e+00> : vector<8x128xf32>
    %27 = tpu.matmul %25, %26, %cst_15 {dimension_numbers = #tpu.dot_dimension_numbers<[1], [0], [0], [1], [0, 0, 1, 1], [], []>} : vector<8x128xbf16>, vector<128x128xbf16>, vector<8x128xf32> -> vector<8x128xf32>
    %c0_16 = arith.constant 0 : index
    %c0_17 = arith.constant 0 : index
    %28 = vector.load %arg7[%c0_16, %c0_17] : memref<1x128xf32, #tpu.memory_space<vmem>>, vector<1x128xf32>
    %29 = vector.broadcast %28 : vector<1x128xf32> to vector<8x128xf32>
    %30 = arith.addf %27, %29 : vector<8x128xf32>
    %c0_18 = arith.constant 0 : index
    %c0_19 = arith.constant 0 : index
    %31 = vector.load %arg9[%c0_18, %c0_19] : memref<8x128xf32, #tpu.memory_space<vmem>>, vector<8x128xf32>
    tpu.vector_store %arg9[%c0_18, %c0_19], %30 {strides = array<i32>} : memref<8x128xf32, #tpu.memory_space<vmem>>, vector<8x128xf32>,
    return
  }
  func.func @transform_0(%arg0: i32) -> (i32, i32) {
    %c0_i32 = arith.constant 0 : i32
    %c0_i32_0 = arith.constant 0 : i32
    return %arg0, %c0_i32 : i32, i32
  }
  func.func @transform_1(%arg0: i32) -> (i32, i32) {
    %c0_i32 = arith.constant 0 : i32
    %c0_i32_0 = arith.constant 0 : i32
    %c0_i32_1 = arith.constant 0 : i32
    return %c0_i32, %c0_i32_0 : i32, i32
  }
  func.func @transform_2(%arg0: i32) -> (i32, i32) {
    %c0_i32 = arith.constant 0 : i32
    %c0_i32_0 = arith.constant 0 : i32
    %c0_i32_1 = arith.constant 0 : i32
    return %c0_i32, %c0_i32_0 : i32, i32
  }
  func.func @transform_3(%arg0: i32) -> (i32, i32) {
    %c0_i32 = arith.constant 0 : i32
    %c0_i32_0 = arith.constant 0 : i32
    %c0_i32_1 = arith.constant 0 : i32
    return %c0_i32, %c0_i32_0 : i32, i32
  }
  func.func @transform_4(%arg0: i32) -> (i32, i32) {
    %c0_i32 = arith.constant 0 : i32
    %c0_i32_0 = arith.constant 0 : i32
    %c0_i32_1 = arith.constant 0 : i32
    return %c0_i32, %c0_i32_0 : i32, i32
  }
  func.func @transform_5(%arg0: i32) -> (i32, i32) {
    %c0_i32 = arith.constant 0 : i32
    %c0_i32_0 = arith.constant 0 : i32
    %c0_i32_1 = arith.constant 0 : i32
    return %c0_i32, %c0_i32_0 : i32, i32
  }
  func.func @transform_6(%arg0: i32) -> (i32, i32) {
    %c0_i32 = arith.constant 0 : i32
    %c0_i32_0 = arith.constant 0 : i32
    %c0_i32_1 = arith.constant 0 : i32
    return %c0_i32, %c0_i32_0 : i32, i32
  }
  func.func @transform_7(%arg0: i32) -> i32 {
    %c0_i32 = arith.constant 0 : i32
    %c0_i32_0 = arith.constant 0 : i32
    return %c0_i32 : i32
  }
  func.func @transform_8(%arg0: i32) -> (i32, i32) {
    %c0_i32 = arith.constant 0 : i32
    %c0_i32_0 = arith.constant 0 : i32
    return %arg0, %c0_i32 : i32, i32
  }
}

</mosaic_0001>

<llo_original>
// kernel: tpu_custom_call.1
$region0: #{tpu_custom_call.1}
  #allocation0 [shape = 'u32[]', space=smem, size = 0x4, offset = 0x4, fixed_abs, tag = 'smem constant byte address 0x4 - core index']
  #allocation1 [shape = 'u32[72,128]{1,0:T(1,128)}', space=vmem, size = 0x9000, scoped, tag = 'internal scratch']
  %s0 = inlined_call_operand.hbm [shape: f32[8,32], index: 0, kind: input, shape index: {}]
  %s1 = inlined_call_operand.hbm [shape: bf16[32,128], index: 1, kind: input, shape index: {}]
  %s2 = inlined_call_operand.vmem [shape: f32[1,128], index: 2, kind: input, shape index: {}]
  %s3 = inlined_call_operand.hbm [shape: bf16[128,128], index: 3, kind: input, shape index: {}]
  %s4 = inlined_call_operand.vmem [shape: f32[1,128], index: 4, kind: input, shape index: {}]
  %s5 = inlined_call_operand.hbm [shape: bf16[128,128], index: 5, kind: input, shape index: {}]
  %s6 = inlined_call_operand.vmem [shape: f32[1,128], index: 6, kind: input, shape index: {}]
  %s7 = inlined_call_operand.vmem [shape: f32[2], index: 7, kind: input, shape index: {}]
  %s8 = inlined_call_operand.hbm [shape: f32[8,128], index: 8, kind: output, shape index: {}]
  %s9 = sld [smem:[#allocation0]]
  $region62: #{tpu_custom_call.1} parent=0
    _
  %s11 = ssub.s32 1, %s9
  %s12 = scalar_select 0, %s11, %s9
  $region1: #{tpu_custom_call.1} parent=0
    #allocation2 [shape = 'u8[4096]{0}', space=vmem, size = 0x1000, scoped, tag = 'input window, operand 0, single buffered']
    #allocation3 [shape = 's32[1]{0}', space=sflag, size = 0x4, scoped, tag = 'scoped memory for tpu_custom_call.1']
    #allocation4 [shape = 's32[1]{0}', space=sflag, size = 0x4, scoped, tag = 'scoped memory for tpu_custom_call.1']
    #allocation5 [shape = 's32[1]{0}', space=sflag, size = 0x4, scoped, tag = 'scoped memory for tpu_custom_call.1']
    #allocation6 [shape = 'u8[8192]{0}', space=vmem, size = 0x2000, scoped, tag = 'input window, operand 1, single buffered']
    #allocation7 [shape = 's32[1]{0}', space=sflag, size = 0x4, scoped, tag = 'scoped memory for tpu_custom_call.1']
    #allocation8 [shape = 'u8[32768]{0}', space=vmem, size = 0x8000, scoped, tag = 'input window, operand 3, single buffered']
    #allocation9 [shape = 'u8[32768]{0}', space=vmem, size = 0x8000, scoped, tag = 'input window, operand 5, single buffered']
    #allocation10 [shape = 's32[1]{0}', space=sflag, size = 0x4, scoped, tag = 'scoped memory for tpu_custom_call.1']
    #allocation11 [shape = 'u8[512]{0}', space=smem, size = 0x200, scoped, tag = 'input window, operand 7, single buffered']
    #allocation12 [shape = 'u8[4096]{0}', space=vmem, size = 0x1000, scoped, tag = 'output window, operand 0, single buffered']
    %13 = vsyncpa [#allocation3], 0
    %14 = vsyncpa [#allocation7], 0
    %15 = vsyncpa [#allocation10], 0
    %16 = vsyncpa [#allocation5], 0
    %17 = vsyncpa [#allocation4], 0
    // Predicated region
    $region2: #{tpu_custom_call.1} parent=1 // pred_check
      _
    $region3: #{tpu_custom_call.1} parent=1 // pred_check_branch
      %19 = sbr.rel (0) target = $region5
    $region4: #{tpu_custom_call.1} parent=1 // pred_region
      %21 = vsyncadd [#allocation3], 0
      %s23 = sshll.u32 %s0, 4
      %s24 = int_to_ptr.hbm [resolvable:$true] %s23
      %s25 = sshll.u32 [#allocation2], 4
      %s26 = int_to_ptr.vmem [resolvable:$true] %s25
      %28 = dma.hbm_to_vmem [thread:$0]  %s24, 128, %s26, [#allocation3]
    $region5: #{tpu_custom_call.1} parent=1 // pred_fallthru
      _
    // Predicated region
    $region6: #{tpu_custom_call.1} parent=1 // pred_check
      _
    $region7: #{tpu_custom_call.1} parent=1 // pred_check_branch
      %30 = sbr.rel (0) target = $region9
    $region8: #{tpu_custom_call.1} parent=1 // pred_region
      %32 = vsyncadd [#allocation7], 0
      %s33 = sshll.u32 %s1, 4
      %s34 = int_to_ptr.hbm [resolvable:$true] %s33
      %s35 = sshll.u32 [#allocation6], 4
      %s36 = int_to_ptr.vmem [resolvable:$true] %s35
      %41 = dma.hbm_to_vmem [thread:$0]  %s34, 256, %s36, [#allocation7], 64, 64, 4
    $region9: #{tpu_custom_call.1} parent=1 // pred_fallthru
      _
    // Predicated region
    $region10: #{tpu_custom_call.1} parent=1 // pred_check
      _
    $region11: #{tpu_custom_call.1} parent=1 // pred_check_branch
      %43 = sbr.rel (0) target = $region13
    $region12: #{tpu_custom_call.1} parent=1 // pred_region
      _
    $region13: #{tpu_custom_call.1} parent=1 // pred_fallthru
      _
    // Predicated region
    $region14: #{tpu_custom_call.1} parent=1 // pred_check
      _
    $region15: #{tpu_custom_call.1} parent=1 // pred_check_branch
      %45 = sbr.rel (0) target = $region17
    $region16: #{tpu_custom_call.1} parent=1 // pred_region
      %47 = vsyncadd [#allocation7], 0
      %s48 = sshll.u32 %s3, 4
      %s49 = int_to_ptr.hbm [resolvable:$true] %s48
      %s50 = sshll.u32 [#allocation8], 4
      %s51 = int_to_ptr.vmem [resolvable:$true] %s50
      %56 = dma.hbm_to_vmem [thread:$0]  %s49, 1024, %s51, [#allocation7], 64, 64, 4
    $region17: #{tpu_custom_call.1} parent=1 // pred_fallthru
      _
    // Predicated region
    $region18: #{tpu_custom_call.1} parent=1 // pred_check
      _
    $region19: #{tpu_custom_call.1} parent=1 // pred_check_branch
      %58 = sbr.rel (0) target = $region21
    $region20: #{tpu_custom_call.1} parent=1 // pred_region
      _
    $region21: #{tpu_custom_call.1} parent=1 // pred_fallthru
      _
    // Predicated region
    $region22: #{tpu_custom_call.1} parent=1 // pred_check
      _
    $region23: #{tpu_custom_call.1} parent=1 // pred_check_branch
      %60 = sbr.rel (0) target = $region25
    $region24: #{tpu_custom_call.1} parent=1 // pred_region
      %62 = vsyncadd [#allocation10], 0
      %s63 = sshll.u32 %s5, 4
      %s64 = int_to_ptr.hbm [resolvable:$true] %s63
      %s65 = sshll.u32 [#allocation9], 4
      %s66 = int_to_ptr.vmem [resolvable:$true] %s65
      %71 = dma.hbm_to_vmem [thread:$0]  %s64, 1024, %s66, [#allocation10], 64, 64, 4
    $region25: #{tpu_custom_call.1} parent=1 // pred_fallthru
      _
    // Predicated region
    $region26: #{tpu_custom_call.1} parent=1 // pred_check
      _
    $region27: #{tpu_custom_call.1} parent=1 // pred_check_branch
      %73 = sbr.rel (0) target = $region29
    $region28: #{tpu_custom_call.1} parent=1 // pred_region
      _
    $region29: #{tpu_custom_call.1} parent=1 // pred_fallthru
      _
    // Predicated region
    $region30: #{tpu_custom_call.1} parent=1 // pred_check
      _
    $region31: #{tpu_custom_call.1} parent=1 // pred_check_branch
      %75 = sbr.rel (0) target = $region33
    $region32: #{tpu_custom_call.1} parent=1 // pred_region
      %77 = vsyncadd [#allocation5], 0
      %s79 = sshll.u32 %s7, 4
      %s80 = int_to_ptr.vmem [resolvable:$true] %s79
      %82 = dma.vmem_to_smem %s80, 16, [#allocation11], [#allocation5]
    $region33: #{tpu_custom_call.1} parent=1 // pred_fallthru
      _
    // Predicated region
    $region34: #{tpu_custom_call.1} parent=1 // pred_check
      _
    $region35: #{tpu_custom_call.1} parent=1 // pred_check_branch
      %84 = sbr.rel (0) target = $region37
    $region36: #{tpu_custom_call.1} parent=1 // pred_region
      %86 = dma.done [#allocation3], 128
    $region37: #{tpu_custom_call.1} parent=1 // pred_fallthru
      _
    // Predicated region
    $region38: #{tpu_custom_call.1} parent=1 // pred_check
      _
    $region39: #{tpu_custom_call.1} parent=1 // pred_check_branch
      %88 = sbr.rel (0) target = $region41
    $region40: #{tpu_custom_call.1} parent=1 // pred_region
      %90 = dma.done [#allocation7], 256
    $region41: #{tpu_custom_call.1} parent=1 // pred_fallthru
      _
    // Predicated region
    $region42: #{tpu_custom_call.1} parent=1 // pred_check
      _
    $region43: #{tpu_custom_call.1} parent=1 // pred_check_branch
      %92 = sbr.rel (0) target = $region45
    $region44: #{tpu_custom_call.1} parent=1 // pred_region
      %94 = dma.done [#allocation7], 1024
    $region45: #{tpu_custom_call.1} parent=1 // pred_fallthru
      _
    // Predicated region
    $region46: #{tpu_custom_call.1} parent=1 // pred_check
      _
    $region47: #{tpu_custom_call.1} parent=1 // pred_check_branch
      %96 = sbr.rel (0) target = $region49
    $region48: #{tpu_custom_call.1} parent=1 // pred_region
      %98 = dma.done [#allocation10], 1024
    $region49: #{tpu_custom_call.1} parent=1 // pred_fallthru
      _
    // Predicated region
    $region50: #{tpu_custom_call.1} parent=1 // pred_check
      _
    $region51: #{tpu_custom_call.1} parent=1 // pred_check_branch
      %100 = sbr.rel (0) target = $region53
    $region52: #{tpu_custom_call.1} parent=1 // pred_region
      %102 = dma.done [#allocation5], 16
    $region53: #{tpu_custom_call.1} parent=1 // pred_fallthru
      _
    %103 = sfence
    %v105 = vld [vmem:[#allocation2] sm:$0xff]
    %s106 = sld [smem:[#allocation11]]
    %v107 = vpack.c.bf16 %v105, %v105
    %v108 = vld [vmem:[#allocation6] sm:$0xf]
    %v109 = vld [vmem:[#allocation6 + $0x4] sm:$0xf]
    %v110 = vld [vmem:[#allocation6 + $0x8] sm:$0xf]
    %v111 = vld [vmem:[#allocation6 + $0xc] sm:$0xf]
    %v112 = vld [vmem:[%s2] sm:$0x1]
    %v114 = vperm.slane %v112, 0
    %v120 = vunpack.c.l.b16 %v108
    %v121 = vunpack.c.l.b16 %v109
    %v122 = vunpack.c.l.b16 %v110
    %v123 = vunpack.c.l.b16 %v111
    %v124 = vpack.c.b16 %v121, %v120
    %v125 = vpack.c.b16 %v123, %v122
    %vm128 = vcmask 261120
    %v130 = vsel %vm128, %v107, 0
    %132 = vmatpush.bf16.msra.mxu0 0
    %133 = vmatpush.bf16.msra.mxu0 0
    %134 = vmatpush.bf16.msra.mxu0 0
    %135 = vmatpush.bf16.msra.mxu0 0
    %136 = vmatpush.bf16.msra.mxu0 0
    %137 = vmatpush.bf16.msra.mxu0 0
    %138 = vmatpush.bf16.msra.mxu0 %v125
    %139 = vmatpush.bf16.msra.mxu0 %v124
    %140 = vmatmul.bf16.gmra.mxu0 %v130
    %v141 = vpop.f32.mrf.mxu0
    %v142 = vadd.f32 %v114, %v141
    %v143 = vpop.f32.mrf.mxu0
    %144 = vdwg.mxu0
    %vm145 = vcmp.gt.f32.partialorder %v142, 0.0
    %v146 = vstv %s106
    %v147 = vmul.f32 %v146, %v142
    %v148 = vsel %vm145, %v142, %v147
    %s149 = sld [smem:[#allocation11 + $0x1]]
    %v150 = vpack.c.bf16 %v148, %v148
    %v151 = vld [vmem:[#allocation8] sm:$0xf]
    %v152 = vld [vmem:[#allocation8 + $0x4] sm:$0xf]
    %v153 = vld [vmem:[#allocation8 + $0x8] sm:$0xf]
    %v154 = vld [vmem:[#allocation8 + $0xc] sm:$0xf]
    %v155 = vld [vmem:[#allocation8 + $0x10] sm:$0xf]
    %v156 = vld [vmem:[#allocation8 + $0x14] sm:$0xf]
    %v157 = vld [vmem:[#allocation8 + $0x18] sm:$0xf]
    %v158 = vld [vmem:[#allocation8 + $0x1c] sm:$0xf]
    %v159 = vld [vmem:[#allocation8 + $0x20] sm:$0xf]
    %v160 = vld [vmem:[#allocation8 + $0x24] sm:$0xf]
    %v161 = vld [vmem:[#allocation8 + $0x28] sm:$0xf]
    %v162 = vld [vmem:[#allocation8 + $0x2c] sm:$0xf]
    %v163 = vld [vmem:[#allocation8 + $0x30] sm:$0xf]
    %v164 = vld [vmem:[#allocation8 + $0x34] sm:$0xf]
    %v165 = vld [vmem:[#allocation8 + $0x38] sm:$0xf]
    %v166 = vld [vmem:[#allocation8 + $0x3c] sm:$0xf]
    %v167 = vld [vmem:[%s4] sm:$0x1]
    %v169 = vperm.slane %v167, 0
    %v187 = vunpack.c.l.b16 %v151
    %v188 = vunpack.c.l.b16 %v152
    %v189 = vunpack.c.l.b16 %v153
    %v190 = vunpack.c.l.b16 %v154
    %v191 = vunpack.c.l.b16 %v155
    %v192 = vunpack.c.l.b16 %v156
    %v193 = vunpack.c.l.b16 %v157
    %v194 = vunpack.c.l.b16 %v158
    %v195 = vunpack.c.l.b16 %v159
    %v196 = vunpack.c.l.b16 %v160
    %v197 = vunpack.c.l.b16 %v161
    %v198 = vunpack.c.l.b16 %v162
    %v199 = vunpack.c.l.b16 %v163
    %v200 = vunpack.c.l.b16 %v164
    %v201 = vunpack.c.l.b16 %v165
    %v202 = vunpack.c.l.b16 %v166
    %v203 = vpack.c.b16 %v188, %v187
    %v204 = vpack.c.b16 %v190, %v189
    %v205 = vpack.c.b16 %v192, %v191
    %v206 = vpack.c.b16 %v194, %v193
    %v207 = vpack.c.b16 %v196, %v195
    %v208 = vpack.c.b16 %v198, %v197
    %v209 = vpack.c.b16 %v200, %v199
    %v210 = vpack.c.b16 %v202, %v201
    %219 = vmatpush.bf16.msra.mxu0 %v210
    %220 = vmatpush.bf16.msra.mxu0 %v209
    %221 = vmatpush.bf16.msra.mxu0 %v208
    %222 = vmatpush.bf16.msra.mxu0 %v207
    %223 = vmatpush.bf16.msra.mxu0 %v206
    %224 = vmatpush.bf16.msra.mxu0 %v205
    %225 = vmatpush.bf16.msra.mxu0 %v204
    %226 = vmatpush.bf16.msra.mxu0 %v203
    %227 = vmatmul.bf16.gmra.mxu0 %v150
    %v228 = vpop.f32.mrf.mxu0
    %v229 = vadd.f32 %v169, %v228
    %v230 = vpop.f32.mrf.mxu0
    %231 = vdwg.mxu0
    %vm232 = vcmp.gt.f32.partialorder %v229, 0.0
    %v233 = vstv %s149
    %v234 = vmul.f32 %v233, %v229
    %v235 = vsel %vm232, %v229, %v234
    %v236 = vpack.c.bf16 %v235, %v235
    %v237 = vld [vmem:[#allocation9] sm:$0xf]
    %v238 = vld [vmem:[#allocation9 + $0x4] sm:$0xf]
    %v239 = vld [vmem:[#allocation9 + $0x8] sm:$0xf]
    %v240 = vld [vmem:[#allocation9 + $0xc] sm:$0xf]
    %v241 = vld [vmem:[#allocation9 + $0x10] sm:$0xf]
    %v242 = vld [vmem:[#allocation9 + $0x14] sm:$0xf]
    %v243 = vld [vmem:[#allocation9 + $0x18] sm:$0xf]
    %v244 = vld [vmem:[#allocation9 + $0x1c] sm:$0xf]
    %v245 = vld [vmem:[#allocation9 + $0x20] sm:$0xf]
    %v246 = vld [vmem:[#allocation9 + $0x24] sm:$0xf]
    %v247 = vld [vmem:[#allocation9 + $0x28] sm:$0xf]
    %v248 = vld [vmem:[#allocation9 + $0x2c] sm:$0xf]
    %v249 = vld [vmem:[#allocation9 + $0x30] sm:$0xf]
    %v250 = vld [vmem:[#allocation9 + $0x34] sm:$0xf]
    %v251 = vld [vmem:[#allocation9 + $0x38] sm:$0xf]
    %v252 = vld [vmem:[#allocation9 + $0x3c] sm:$0xf]
    %v253 = vld [vmem:[%s6] sm:$0x1]
    %v255 = vperm.slane %v253, 0
    %v273 = vunpack.c.l.b16 %v237
    %v274 = vunpack.c.l.b16 %v238
    %v275 = vunpack.c.l.b16 %v239
    %v276 = vunpack.c.l.b16 %v240
    %v277 = vunpack.c.l.b16 %v241
    %v278 = vunpack.c.l.b16 %v242
    %v279 = vunpack.c.l.b16 %v243
    %v280 = vunpack.c.l.b16 %v244
    %v281 = vunpack.c.l.b16 %v245
    %v282 = vunpack.c.l.b16 %v246
    %v283 = vunpack.c.l.b16 %v247
    %v284 = vunpack.c.l.b16 %v248
    %v285 = vunpack.c.l.b16 %v249
    %v286 = vunpack.c.l.b16 %v250
    %v287 = vunpack.c.l.b16 %v251
    %v288 = vunpack.c.l.b16 %v252
    %v289 = vpack.c.b16 %v274, %v273
    %v290 = vpack.c.b16 %v276, %v275
    %v291 = vpack.c.b16 %v278, %v277
    %v292 = vpack.c.b16 %v280, %v279
    %v293 = vpack.c.b16 %v282, %v281
    %v294 = vpack.c.b16 %v284, %v283
    %v295 = vpack.c.b16 %v286, %v285
    %v296 = vpack.c.b16 %v288, %v287
    %305 = vmatpush.bf16.msra.mxu0 %v296
    %306 = vmatpush.bf16.msra.mxu0 %v295
    %307 = vmatpush.bf16.msra.mxu0 %v294
    %308 = vmatpush.bf16.msra.mxu0 %v293
    %309 = vmatpush.bf16.msra.mxu0 %v292
    %310 = vmatpush.bf16.msra.mxu0 %v291
    %311 = vmatpush.bf16.msra.mxu0 %v290
    %312 = vmatpush.bf16.msra.mxu0 %v289
    %313 = vmatmul.bf16.gmra.mxu0 %v236
    %v314 = vpop.f32.mrf.mxu0
    %v315 = vadd.f32 %v255, %v314
    %v316 = vpop.f32.mrf.mxu0
    %317 = vdwg.mxu0
    %318 = vst [vmem:[#allocation12] sm:$0xff] %v315
    // Predicated region
    $region54: #{tpu_custom_call.1} parent=1 // pred_check
      _
    $region55: #{tpu_custom_call.1} parent=1 // pred_check_branch
      %320 = sbr.rel (0) target = $region57
    $region56: #{tpu_custom_call.1} parent=1 // pred_region
      %322 = vsyncadd [#allocation4], 0
      %s324 = sshll.u32 [#allocation12], 4
      %s325 = int_to_ptr.vmem [resolvable:$true] %s324
      %s326 = sshll.u32 %s8, 4
      %s327 = int_to_ptr.hbm [resolvable:$true] %s326
      %329 = dma.vmem_to_hbm [thread:$0]  %s325, 128, %s327, [#allocation4]
    $region57: #{tpu_custom_call.1} parent=1 // pred_fallthru
      _
    // Predicated region
    $region58: #{tpu_custom_call.1} parent=1 // pred_check
      _
    $region59: #{tpu_custom_call.1} parent=1 // pred_check_branch
      %331 = sbr.rel (0) target = $region61
    $region60: #{tpu_custom_call.1} parent=1 // pred_region
      %333 = dma.done [#allocation4], 128
    $region61: #{tpu_custom_call.1} parent=1 // pred_fallthru
      _
    %334 = vsyncpa [#allocation3], 1
    %335 = vsyncpa [#allocation7], 1
    %336 = vsyncpa [#allocation10], 1
    %337 = vsyncpa [#allocation4], 1
    %338 = vsyncpa [#allocation5], 1

</llo_original>
